<compile_context>
chip_gen: v7x
topology: tpu7x:2x2x1
jax: 0.10.0
libtpu: 0.0.40
codegen_flags: <defaults>
</compile_context>

<pallas_src>
import functools

import jax
import jax.numpy as jnp
from jax.experimental import pallas as pl
from jax.experimental.pallas import tpu as pltpu


def _round_up(x, m):
    return ((x + m - 1) // m) * m


def _mlp_kernel(x_ref, w1_ref, b1_ref, w2_ref, b2_ref, out_ref):
    # In-kernel cast to the compute dtype (no wrapper-side cast of the x stream).
    x = x_ref[...].astype(w1_ref.dtype)                                 # (TB, D)
    h = jnp.dot(x, w1_ref[...], preferred_element_type=jnp.float32)     # (TB, Hp) f32 acc
    h = jnp.maximum(h + b1_ref[...], 0.0)                               # bias + ReLU in f32
    h = h.astype(w2_ref.dtype)                                          # back to compute dtype for MXU
    o = jnp.dot(h, w2_ref[...], preferred_element_type=jnp.float32)     # (TB, Cp) f32 acc
    out_ref[...] = (o + b2_ref[...]).astype(out_ref.dtype)              # cast on store


def prepare_params(w1, b1, w2, b2, compute_dtype=jnp.float32):
    """Pad hidden/class dims to 128 lanes and cast weights to the compute dtype.

    Call ONCE and reuse the result across nn_forward calls (weights are small but
    per-call pad/convert HLOs add fixed latency for small-batch inference).
    Zero padding is numerically exact through matmul/bias/ReLU.
    """
    D, H = w1.shape
    C = w2.shape[1]
    H_pad = _round_up(H, 128)
    C_pad = _round_up(C, 128)
    w1_p = jnp.zeros((D, H_pad), jnp.float32).at[:, :H].set(w1).astype(compute_dtype)
    b1_p = jnp.zeros((1, H_pad), jnp.float32).at[:, :H].set(b1)          # biases stay f32
    w2_p = jnp.zeros((H_pad, C_pad), jnp.float32).at[:H, :C].set(w2).astype(compute_dtype)
    b2_p = jnp.zeros((1, C_pad), jnp.float32).at[:, :C].set(b2)
    return (w1_p, b1_p, w2_p, b2_p)


@functools.partial(jax.jit, static_argnames=("num_classes", "block_b"))
def nn_forward(x, params, num_classes, *, block_b=1024):
    """Forward pass of the 2-layer MLP as a single fused Pallas kernel.

    x      : (B, D) float32 (or bf16 at rest for the bf16 fast path)
    params : output of prepare_params()
    returns (B, num_classes) in the compute dtype of params
    """
    w1_p, b1_p, w2_p, b2_p = params
    B, D = x.shape
    H_pad = w1_p.shape[1]
    C_pad = w2_p.shape[1]
    out_dtype = w1_p.dtype      # bf16 output on the bf16 path halves the padded writeback

    # Batch tile: multiple of 16 (bf16 sublane packing), capped at block_b (fits v5e's
    # 16 MiB scoped VMEM in f32 at D=784), and at ~B/2 so that for large B there are
    # >= 2 grid steps to shard across v7x's two TensorCores. No padding of x: the
    # ragged last tile is handled by Pallas (OOB reads are unspecified but each output
    # row depends only on its own input row; OOB writes are discarded).
    tb = max(16, min(block_b, _round_up((B + 1) // 2, 16)))
    num_tiles = pl.cdiv(B, tb)

    in_itemsize = jnp.dtype(x.dtype).itemsize
    w_itemsize = jnp.dtype(w1_p.dtype).itemsize
    cost = pl.CostEstimate(
        flops=2 * B * (D * H_pad + H_pad * C_pad),
        transcendentals=0,
        bytes_accessed=(B * D * in_itemsize
                        + (D * H_pad + H_pad * C_pad) * w_itemsize
                        + (H_pad + C_pad) * 4
                        + B * C_pad * jnp.dtype(out_dtype).itemsize),
    )

    out_pad = pl.pallas_call(
        _mlp_kernel,
        out_shape=jax.ShapeDtypeStruct((B, C_pad), out_dtype),
        grid=(num_tiles,),
        in_specs=[
            pl.BlockSpec((tb, D), lambda i: (i, 0)),         # x: pipelined over batch
            pl.BlockSpec((D, H_pad), lambda i: (0, 0)),      # w1: VMEM-resident
            pl.BlockSpec((1, H_pad), lambda i: (0, 0)),      # b1
            pl.BlockSpec((H_pad, C_pad), lambda i: (0, 0)),  # w2
            pl.BlockSpec((1, C_pad), lambda i: (0, 0)),      # b2
        ],
        out_specs=pl.BlockSpec((tb, C_pad), lambda i: (i, 0)),   # lane-dense output tile
        compiler_params=pltpu.CompilerParams(
            dimension_semantics=("parallel",),               # megacore shard on v7x
        ),
        cost_estimate=cost,
    )(x, w1_p, b1_p, w2_p, b2_p)

    # Strip the class padding (tiny wrapper-side slice).
    return out_pad[:, :num_classes]


def init_params(key, input_size, num_classes, hidden=100):
    """Deterministic init mimicking nn.Linear (uniform +/- 1/sqrt(fan_in))."""
    k1, k2, k3, k4 = jax.random.split(key, 4)
    bound1 = 1.0 / jnp.sqrt(input_size)
    bound2 = 1.0 / jnp.sqrt(hidden)
    w1 = jax.random.uniform(k1, (input_size, hidden), jnp.float32, -bound1, bound1)
    b1 = jax.random.uniform(k2, (1, hidden), jnp.float32, -bound1, bound1)
    w2 = jax.random.uniform(k3, (hidden, num_classes), jnp.float32, -bound2, bound2)
    b2 = jax.random.uniform(k4, (1, num_classes), jnp.float32, -bound2, bound2)
    return w1, b1, w2, b2


if __name__ == "__main__":
    key = jax.random.PRNGKey(0)
    kx, kp = jax.random.split(key)

    batch = 8            # intentionally not a multiple of 16 -> exercises ragged tile
    input_size = 256     # small stand-in for 784 (MNIST flattened)
    num_classes = 10
    hidden = 100         # fixed by the module definition

    x = jax.random.normal(kx, (batch, input_size), jnp.float32)
    w1, b1, w2, b2 = init_params(kp, input_size, num_classes, hidden)

    # --- f32 path: exact check against the plain-JAX reference -------------------
    params_f32 = prepare_params(w1, b1, w2, b2, compute_dtype=jnp.float32)
    out = nn_forward(x, params_f32, num_classes)
    out = jax.block_until_ready(out)
    ref = jnp.maximum(x @ w1 + b1, 0.0) @ w2 + b2
    assert out.shape == (batch, num_classes)
    assert out.dtype == jnp.float32
    assert jnp.allclose(out, ref, atol=1e-5, rtol=1e-5)

    # --- bf16 path (v5e/v6e/v7x fast path): x cast happens inside the kernel -----
    params_bf16 = prepare_params(w1, b1, w2, b2, compute_dtype=jnp.bfloat16)
    out_bf = nn_forward(x, params_bf16, num_classes)
    out_bf = jax.block_until_ready(out_bf)
    xb = x.astype(jnp.bfloat16).astype(jnp.float32)
    w1b = w1.astype(jnp.bfloat16).astype(jnp.float32)
    w2b = w2.astype(jnp.bfloat16).astype(jnp.float32)
    hb = jnp.maximum(xb @ w1b + b1, 0.0).astype(jnp.bfloat16).astype(jnp.float32)
    ref_bf = hb @ w2b + b2
    assert out_bf.shape == (batch, num_classes)
    assert out_bf.dtype == jnp.bfloat16
    assert jnp.allclose(out_bf.astype(jnp.float32), ref_bf, atol=2e-2, rtol=2e-2)

    print("KERNEL_OK")
</pallas_src>

<mosaic_0001>
module attributes {stable_mosaic.version = 11 : i64} {
  func.func @_mlp_kernel(%arg0: i32, %arg1: memref<16x256xf32, #tpu.memory_space<vmem>>, %arg2: memref<256x128xf32, #tpu.memory_space<vmem>>, %arg3: memref<1x128xf32, #tpu.memory_space<vmem>>, %arg4: memref<128x128xf32, #tpu.memory_space<vmem>>, %arg5: memref<1x128xf32, #tpu.memory_space<vmem>>, %arg6: memref<16x128xf32, #tpu.memory_space<vmem>>) attributes {dimension_semantics = [#tpu.dimension_semantics<parallel>], iteration_bounds = array<i64: 1>, scalar_prefetch = 0 : i64, scratch_operands = 0 : i64, tpu.core_type = #tpu.core_type<tc>, window_params = [{transform_indices = @transform_0, window_bounds = array<i64: 16, 256>}, {pipeline_mode = #tpu.pipeline_mode<synchronous>, transform_indices = @transform_1, window_bounds = array<i64: 256, 128>}, {pipeline_mode = #tpu.pipeline_mode<synchronous>, transform_indices = @transform_2, window_bounds = array<i64: 1, 128>}, {pipeline_mode = #tpu.pipeline_mode<synchronous>, transform_indices = @transform_3, window_bounds = array<i64: 128, 128>}, {pipeline_mode = #tpu.pipeline_mode<synchronous>, transform_indices = @transform_4, window_bounds = array<i64: 1, 128>}, {transform_indices = @transform_5, window_bounds = array<i64: 16, 128>}]} {
    %c0 = arith.constant 0 : index
    %c0_0 = arith.constant 0 : index
    %0 = vector.load %arg1[%c0, %c0_0] : memref<16x256xf32, #tpu.memory_space<vmem>>, vector<16x256xf32>
    %c0_1 = arith.constant 0 : index
    %c0_2 = arith.constant 0 : index
    %1 = vector.load %arg2[%c0_1, %c0_2] : memref<256x128xf32, #tpu.memory_space<vmem>>, vector<256x128xf32>
    %cst = arith.constant dense<0.000000e+00> : vector<16x128xf32>
    %2 = tpu.matmul %0, %1, %cst {dimension_numbers = #tpu.dot_dimension_numbers<[1], [0], [0], [1], [0, 0, 1, 1], [], []>} : vector<16x256xf32>, vector<256x128xf32>, vector<16x128xf32> -> vector<16x128xf32>
    %c0_3 = arith.constant 0 : index
    %c0_4 = arith.constant 0 : index
    %3 = vector.load %arg3[%c0_3, %c0_4] : memref<1x128xf32, #tpu.memory_space<vmem>>, vector<1x128xf32>
    %4 = vector.broadcast %3 : vector<1x128xf32> to vector<16x128xf32>
    %5 = arith.addf %2, %4 : vector<16x128xf32>
    %cst_5 = arith.constant 0.000000e+00 : f32
    %6 = vector.broadcast %cst_5 : f32 to vector<16x128xf32>
    %7 = arith.maximumf %5, %6 : vector<16x128xf32>
    %c0_6 = arith.constant 0 : index
    %c0_7 = arith.constant 0 : index
    %8 = vector.load %arg4[%c0_6, %c0_7] : memref<128x128xf32, #tpu.memory_space<vmem>>, vector<128x128xf32>
    %cst_8 = arith.constant dense<0.000000e+00> : vector<16x128xf32>
    %9 = tpu.matmul %7, %8, %cst_8 {dimension_numbers = #tpu.dot_dimension_numbers<[1], [0], [0], [1], [0, 0, 1, 1], [], []>} : vector<16x128xf32>, vector<128x128xf32>, vector<16x128xf32> -> vector<16x128xf32>
    %c0_9 = arith.constant 0 : index
    %c0_10 = arith.constant 0 : index
    %10 = vector.load %arg5[%c0_9, %c0_10] : memref<1x128xf32, #tpu.memory_space<vmem>>, vector<1x128xf32>
    %11 = vector.broadcast %10 : vector<1x128xf32> to vector<16x128xf32>
    %12 = arith.addf %9, %11 : vector<16x128xf32>
    %c0_11 = arith.constant 0 : index
    %c0_12 = arith.constant 0 : index
    %13 = vector.load %arg6[%c0_11, %c0_12] : memref<16x128xf32, #tpu.memory_space<vmem>>, vector<16x128xf32>
    tpu.vector_store %arg6[%c0_11, %c0_12], %12 {strides = array<i32>} : memref<16x128xf32, #tpu.memory_space<vmem>>, vector<16x128xf32>,
    return
  }
  func.func @transform_0(%arg0: i32) -> (i32, i32) {
    %c0_i32 = arith.constant 0 : i32
    %c0_i32_0 = arith.constant 0 : i32
    return %arg0, %c0_i32 : i32, i32
  }
  func.func @transform_1(%arg0: i32) -> (i32, i32) {
    %c0_i32 = arith.constant 0 : i32
    %c0_i32_0 = arith.constant 0 : i32
    %c0_i32_1 = arith.constant 0 : i32
    return %c0_i32, %c0_i32_0 : i32, i32
  }
  func.func @transform_2(%arg0: i32) -> (i32, i32) {
    %c0_i32 = arith.constant 0 : i32
    %c0_i32_0 = arith.constant 0 : i32
    %c0_i32_1 = arith.constant 0 : i32
    return %c0_i32, %c0_i32_0 : i32, i32
  }
  func.func @transform_3(%arg0: i32) -> (i32, i32) {
    %c0_i32 = arith.constant 0 : i32
    %c0_i32_0 = arith.constant 0 : i32
    %c0_i32_1 = arith.constant 0 : i32
    return %c0_i32, %c0_i32_0 : i32, i32
  }
  func.func @transform_4(%arg0: i32) -> (i32, i32) {
    %c0_i32 = arith.constant 0 : i32
    %c0_i32_0 = arith.constant 0 : i32
    %c0_i32_1 = arith.constant 0 : i32
    return %c0_i32, %c0_i32_0 : i32, i32
  }
  func.func @transform_5(%arg0: i32) -> (i32, i32) {
    %c0_i32 = arith.constant 0 : i32
    %c0_i32_0 = arith.constant 0 : i32
    return %arg0, %c0_i32 : i32, i32
  }
}

</mosaic_0001>

<llo_original>
// kernel: nn_forward.1
$region0: #{nn_forward.1}
  #allocation0 [shape = 'u32[]', space=smem, size = 0x4, offset = 0x4, fixed_abs, tag = 'smem constant byte address 0x4 - core index']
  #allocation1 [shape = 'u32[144,128]{1,0:T(1,128)}', space=vmem, size = 0x12000, scoped, tag = 'internal scratch']
  %s0 = inlined_call_operand.hbm [shape: f32[8,256], index: 0, kind: input, shape index: {}]
  %s1 = inlined_call_operand.hbm [shape: f32[256,128], index: 1, kind: input, shape index: {}]
  %s2 = inlined_call_operand.vmem [shape: f32[1,128], index: 2, kind: input, shape index: {}]
  %s3 = inlined_call_operand.hbm [shape: f32[128,128], index: 3, kind: input, shape index: {}]
  %s4 = inlined_call_operand.vmem [shape: f32[1,128], index: 4, kind: input, shape index: {}]
  %s5 = inlined_call_operand.hbm [shape: f32[8,128], index: 5, kind: output, shape index: {}]
  %s6 = sld [smem:[#allocation0]]
  $region42: #{nn_forward.1} parent=0
    _
  %s8 = ssub.s32 1, %s6
  %s9 = scalar_select 0, %s8, %s6
  $region1: #{nn_forward.1} parent=0
    #allocation2 [shape = 'u8[16384]{0}', space=vmem, size = 0x4000, scoped, tag = 'input window, operand 0, single buffered']
    #allocation3 [shape = 's32[1]{0}', space=sflag, size = 0x4, scoped, tag = 'scoped memory for nn_forward.1']
    #allocation4 [shape = 's32[1]{0}', space=sflag, size = 0x4, scoped, tag = 'scoped memory for nn_forward.1']
    #allocation5 [shape = 'u8[131072]{0}', space=vmem, size = 0x20000, scoped, tag = 'input window, operand 1, single buffered']
    #allocation6 [shape = 's32[1]{0}', space=sflag, size = 0x4, scoped, tag = 'scoped memory for nn_forward.1']
    #allocation7 [shape = 'u8[65536]{0}', space=vmem, size = 0x10000, scoped, tag = 'input window, operand 3, single buffered']
    #allocation8 [shape = 'u8[8192]{0}', space=vmem, size = 0x2000, scoped, tag = 'output window, operand 0, single buffered']
    %10 = vsyncpa [#allocation3], 0
    %11 = vsyncpa [#allocation6], 0
    %12 = vsyncpa [#allocation4], 0
    // Predicated region
    $region2: #{nn_forward.1} parent=1 // pred_check
      _
    $region3: #{nn_forward.1} parent=1 // pred_check_branch
      %14 = sbr.rel (0) target = $region5
    $region4: #{nn_forward.1} parent=1 // pred_region
      %s16 = ssub.s32 512, 256
      %17 = vsyncadd [#allocation3], %s16
      %s18 = sshll.u32 [#allocation2], 4
      %s19 = int_to_ptr.vmem [resolvable:$true] %s18
      %24 = dma.hbm_to_vmem [thread:$0]  %s0, 256, %s19, [#allocation3], 256, 256, 16
    $region5: #{nn_forward.1} parent=1 // pred_fallthru
      _
    // Predicated region
    $region6: #{nn_forward.1} parent=1 // pred_check
      _
    $region7: #{nn_forward.1} parent=1 // pred_check_branch
      %26 = sbr.rel (0) target = $region9
    $region8: #{nn_forward.1} parent=1 // pred_region
      %s28 = ssub.s32 4096, 4096
      %29 = vsyncadd [#allocation6], %s28
      %s30 = sshll.u32 [#allocation5], 4
      %s31 = int_to_ptr.vmem [resolvable:$true] %s30
      %36 = dma.hbm_to_vmem [thread:$0]  %s1, 4096, %s31, [#allocation6], 128, 128, 8
    $region9: #{nn_forward.1} parent=1 // pred_fallthru
      _
    // Predicated region
    $region10: #{nn_forward.1} parent=1 // pred_check
      _
    $region11: #{nn_forward.1} parent=1 // pred_check_branch
      %38 = sbr.rel (0) target = $region13
    $region12: #{nn_forward.1} parent=1 // pred_region
      _
    $region13: #{nn_forward.1} parent=1 // pred_fallthru
      _
    // Predicated region
    $region14: #{nn_forward.1} parent=1 // pred_check
      _
    $region15: #{nn_forward.1} parent=1 // pred_check_branch
      %40 = sbr.rel (0) target = $region17
    $region16: #{nn_forward.1} parent=1 // pred_region
      %s42 = ssub.s32 2048, 2048
      %43 = vsyncadd [#allocation6], %s42
      %s44 = sshll.u32 [#allocation7], 4
      %s45 = int_to_ptr.vmem [resolvable:$true] %s44
      %50 = dma.hbm_to_vmem [thread:$0]  %s3, 2048, %s45, [#allocation6], 128, 128, 8
    $region17: #{nn_forward.1} parent=1 // pred_fallthru
      _
    // Predicated region
    $region18: #{nn_forward.1} parent=1 // pred_check
      _
    $region19: #{nn_forward.1} parent=1 // pred_check_branch
      %52 = sbr.rel (0) target = $region21
    $region20: #{nn_forward.1} parent=1 // pred_region
      _
    $region21: #{nn_forward.1} parent=1 // pred_fallthru
      _
    // Predicated region
    $region22: #{nn_forward.1} parent=1 // pred_check
      _
    $region23: #{nn_forward.1} parent=1 // pred_check_branch
      %54 = sbr.rel (0) target = $region25
    $region24: #{nn_forward.1} parent=1 // pred_region
      %55 = dma.done [#allocation3], 512
    $region25: #{nn_forward.1} parent=1 // pred_fallthru
      _
    // Predicated region
    $region26: #{nn_forward.1} parent=1 // pred_check
      _
    $region27: #{nn_forward.1} parent=1 // pred_check_branch
      %57 = sbr.rel (0) target = $region29
    $region28: #{nn_forward.1} parent=1 // pred_region
      %58 = dma.done [#allocation6], 4096
    $region29: #{nn_forward.1} parent=1 // pred_fallthru
      _
    // Predicated region
    $region30: #{nn_forward.1} parent=1 // pred_check
      _
    $region31: #{nn_forward.1} parent=1 // pred_check_branch
      %60 = sbr.rel (0) target = $region33
    $region32: #{nn_forward.1} parent=1 // pred_region
      %61 = dma.done [#allocation6], 2048
    $region33: #{nn_forward.1} parent=1 // pred_fallthru
      _
    %v62 = vld [vmem:[#allocation2] sm:$0xff]
    %v63 = vld [vmem:[#allocation2 + $0x8] sm:$0xff]
    %v64 = vld [vmem:[#allocation2 + $0x10] sm:$0xff]
    %v65 = vld [vmem:[#allocation2 + $0x18] sm:$0xff]
    %v66 = vld [vmem:[#allocation5] sm:$0xff]
    %v67 = vld [vmem:[#allocation5 + $0x8] sm:$0xff]
    %v68 = vld [vmem:[#allocation5 + $0x10] sm:$0xff]
    %v69 = vld [vmem:[#allocation5 + $0x18] sm:$0xff]
    %v70 = vld [vmem:[#allocation5 + $0x20] sm:$0xff]
    %v71 = vld [vmem:[#allocation5 + $0x28] sm:$0xff]
    %v72 = vld [vmem:[#allocation5 + $0x30] sm:$0xff]
    %v73 = vld [vmem:[#allocation5 + $0x38] sm:$0xff]
    %v74 = vld [vmem:[#allocation5 + $0x40] sm:$0xff]
    %v75 = vld [vmem:[#allocation5 + $0x48] sm:$0xff]
    %v76 = vld [vmem:[#allocation5 + $0x50] sm:$0xff]
    %v77 = vld [vmem:[#allocation5 + $0x58] sm:$0xff]
    %v78 = vld [vmem:[#allocation5 + $0x60] sm:$0xff]
    %v79 = vld [vmem:[#allocation5 + $0x68] sm:$0xff]
    %v80 = vld [vmem:[#allocation5 + $0x70] sm:$0xff]
    %v81 = vld [vmem:[#allocation5 + $0x78] sm:$0xff]
    %v82 = vld [vmem:[#allocation5 + $0x80] sm:$0xff]
    %v83 = vld [vmem:[#allocation5 + $0x88] sm:$0xff]
    %v84 = vld [vmem:[#allocation5 + $0x90] sm:$0xff]
    %v85 = vld [vmem:[#allocation5 + $0x98] sm:$0xff]
    %v86 = vld [vmem:[#allocation5 + $0xa0] sm:$0xff]
    %v87 = vld [vmem:[#allocation5 + $0xa8] sm:$0xff]
    %v88 = vld [vmem:[#allocation5 + $0xb0] sm:$0xff]
    %v89 = vld [vmem:[#allocation5 + $0xb8] sm:$0xff]
    %v90 = vld [vmem:[#allocation5 + $0xc0] sm:$0xff]
    %v91 = vld [vmem:[#allocation5 + $0xc8] sm:$0xff]
    %v92 = vld [vmem:[#allocation5 + $0xd0] sm:$0xff]
    %v93 = vld [vmem:[#allocation5 + $0xd8] sm:$0xff]
    %v94 = vld [vmem:[#allocation5 + $0xe0] sm:$0xff]
    %v95 = vld [vmem:[#allocation5 + $0xe8] sm:$0xff]
    %v96 = vld [vmem:[#allocation5 + $0xf0] sm:$0xff]
    %v97 = vld [vmem:[#allocation5 + $0xf8] sm:$0xff]
    %v98 = vld [vmem:[%s2] sm:$0x1]
    %v100 = vlaneseq
    %v101 = vshrl.u32 %v100, 7
    %v102 = vsub.s32 0, %v101
    %v103 = vrot.slane %v98, %v102
    %105 = vmatprep.subr.mxu0 0.0
    %106 = vmatpush1.msra.mxu0 %v66
    %107 = vmatprep.subr.mxu0 0.0
    %108 = vmatpush1.msra.mxu0 %v67
    %109 = vmatprep.subr.mxu0 0.0
    %110 = vmatpush1.msra.mxu0 %v68
    %111 = vmatprep.subr.mxu0 0.0
    %112 = vmatpush1.msra.mxu0 %v69
    %113 = vmatprep.subr.mxu0 0.0
    %114 = vmatpush1.msra.mxu0 %v70
    %115 = vmatprep.subr.mxu0 0.0
    %116 = vmatpush1.msra.mxu0 %v71
    %117 = vmatprep.subr.mxu0 0.0
    %118 = vmatpush1.msra.mxu0 %v72
    %119 = vmatprep.subr.mxu0 0.0
    %120 = vmatpush1.msra.mxu0 %v73
    %121 = vmatprep.subr.mxu0 0.0
    %122 = vmatpush1.msra.mxu0 %v74
    %123 = vmatprep.subr.mxu0 0.0
    %124 = vmatpush1.msra.mxu0 %v75
    %125 = vmatprep.subr.mxu0 0.0
    %126 = vmatpush1.msra.mxu0 %v76
    %127 = vmatprep.subr.mxu0 0.0
    %128 = vmatpush1.msra.mxu0 %v77
    %129 = vmatprep.subr.mxu0 0.0
    %130 = vmatpush1.msra.mxu0 %v78
    %131 = vmatprep.subr.mxu0 0.0
    %132 = vmatpush1.msra.mxu0 %v79
    %133 = vmatprep.subr.mxu0 0.0
    %134 = vmatpush1.msra.mxu0 %v80
    %135 = vmatprep.subr.mxu0 0.0
    %136 = vmatpush1.msra.mxu0 %v81
    %137 = vmatprep.subr.mxu0 0.0
    %138 = vmatpush1.msra.mxu0 %v82
    %139 = vmatprep.subr.mxu0 0.0
    %140 = vmatpush1.msra.mxu0 %v83
    %141 = vmatprep.subr.mxu0 0.0
    %142 = vmatpush1.msra.mxu0 %v84
    %143 = vmatprep.subr.mxu0 0.0
    %144 = vmatpush1.msra.mxu0 %v85
    %145 = vmatprep.subr.mxu0 0.0
    %146 = vmatpush1.msra.mxu0 %v86
    %147 = vmatprep.subr.mxu0 0.0
    %148 = vmatpush1.msra.mxu0 %v87
    %149 = vmatprep.subr.mxu0 0.0
    %150 = vmatpush1.msra.mxu0 %v88
    %151 = vmatprep.subr.mxu0 0.0
    %152 = vmatpush1.msra.mxu0 %v89
    %153 = vmatprep.subr.mxu0 0.0
    %154 = vmatpush1.msra.mxu0 %v90
    %155 = vmatprep.subr.mxu0 0.0
    %156 = vmatpush1.msra.mxu0 %v91
    %157 = vmatprep.subr.mxu0 0.0
    %158 = vmatpush1.msra.mxu0 %v92
    %159 = vmatprep.subr.mxu0 0.0
    %160 = vmatpush1.msra.mxu0 %v93
    %161 = vmatprep.subr.mxu0 0.0
    %162 = vmatpush1.msra.mxu0 %v94
    %163 = vmatprep.subr.mxu0 0.0
    %164 = vmatpush1.msra.mxu0 %v95
    %165 = vmatprep.subr.mxu0 0.0
    %166 = vmatpush1.msra.mxu0 %v96
    %167 = vmatprep.subr.mxu0 0.0
    %168 = vmatpush1.msra.mxu0 %v97
    %169 = vmatprep.mubr.f32.mxu0 %v63
    %170 = vmatmul.mubr.f32.gmra.mrb[0].mxu0 %v62
    %v171 = vpop.f32.mrb[0].mxu0
    %v172 = vadd.f32 %v103, %v171
    %v173 = vpop.f32.mrb[0].mxu0
    %174 = vmatprep.mubr.f32.mxu0 %v65
    %175 = vmatmul.mubr.f32.gmra.mrb[0].mxu0 %v64
    %v176 = vpop.f32.mrb[0].mxu0
    %v177 = vadd.f32 %v103, %v176
    %v178 = vpop.f32.mrb[0].mxu0
    %179 = vdwg.mxu0
    %v180 = vmax.f32 %v172, 0.0
    %v181 = vmax.f32 %v177, 0.0
    %v182 = vld [vmem:[#allocation7] sm:$0xff]
    %v183 = vld [vmem:[#allocation7 + $0x8] sm:$0xff]
    %v184 = vld [vmem:[#allocation7 + $0x10] sm:$0xff]
    %v185 = vld [vmem:[#allocation7 + $0x18] sm:$0xff]
    %v186 = vld [vmem:[#allocation7 + $0x20] sm:$0xff]
    %v187 = vld [vmem:[#allocation7 + $0x28] sm:$0xff]
    %v188 = vld [vmem:[#allocation7 + $0x30] sm:$0xff]
    %v189 = vld [vmem:[#allocation7 + $0x38] sm:$0xff]
    %v190 = vld [vmem:[#allocation7 + $0x40] sm:$0xff]
    %v191 = vld [vmem:[#allocation7 + $0x48] sm:$0xff]
    %v192 = vld [vmem:[#allocation7 + $0x50] sm:$0xff]
    %v193 = vld [vmem:[#allocation7 + $0x58] sm:$0xff]
    %v194 = vld [vmem:[#allocation7 + $0x60] sm:$0xff]
    %v195 = vld [vmem:[#allocation7 + $0x68] sm:$0xff]
    %v196 = vld [vmem:[#allocation7 + $0x70] sm:$0xff]
    %v197 = vld [vmem:[#allocation7 + $0x78] sm:$0xff]
    %v198 = vld [vmem:[%s4] sm:$0x1]
    %v200 = vlaneseq
    %v201 = vshrl.u32 %v200, 7
    %v202 = vsub.s32 0, %v201
    %v203 = vrot.slane %v198, %v202
    %205 = vmatprep.subr.mxu0 0.0
    %206 = vmatpush1.msra.mxu0 %v182
    %207 = vmatprep.subr.mxu0 0.0
    %208 = vmatpush1.msra.mxu0 %v183
    %209 = vmatprep.subr.mxu0 0.0
    %210 = vmatpush1.msra.mxu0 %v184
    %211 = vmatprep.subr.mxu0 0.0
    %212 = vmatpush1.msra.mxu0 %v185
    %213 = vmatprep.subr.mxu0 0.0
    %214 = vmatpush1.msra.mxu0 %v186
    %215 = vmatprep.subr.mxu0 0.0
    %216 = vmatpush1.msra.mxu0 %v187
    %217 = vmatprep.subr.mxu0 0.0
    %218 = vmatpush1.msra.mxu0 %v188
    %219 = vmatprep.subr.mxu0 0.0
    %220 = vmatpush1.msra.mxu0 %v189
    %221 = vmatprep.subr.mxu0 0.0
    %222 = vmatpush1.msra.mxu0 %v190
    %223 = vmatprep.subr.mxu0 0.0
    %224 = vmatpush1.msra.mxu0 %v191
    %225 = vmatprep.subr.mxu0 0.0
    %226 = vmatpush1.msra.mxu0 %v192
    %227 = vmatprep.subr.mxu0 0.0
    %228 = vmatpush1.msra.mxu0 %v193
    %229 = vmatprep.subr.mxu0 0.0
    %230 = vmatpush1.msra.mxu0 %v194
    %231 = vmatprep.subr.mxu0 0.0
    %232 = vmatpush1.msra.mxu0 %v195
    %233 = vmatprep.subr.mxu0 0.0
    %234 = vmatpush1.msra.mxu0 %v196
    %235 = vmatprep.subr.mxu0 0.0
    %236 = vmatpush1.msra.mxu0 %v197
    %237 = vmatprep.subr.mxu0 0.0
    %238 = vmatpush1.msra.mxu0 0.0
    %239 = vmatprep.subr.mxu0 0.0
    %240 = vmatpush1.msra.mxu0 0.0
    %241 = vmatprep.subr.mxu0 0.0
    %242 = vmatpush1.msra.mxu0 0.0
    %243 = vmatprep.subr.mxu0 0.0
    %244 = vmatpush1.msra.mxu0 0.0
    %245 = vmatprep.subr.mxu0 0.0
    %246 = vmatpush1.msra.mxu0 0.0
    %247 = vmatprep.subr.mxu0 0.0
    %248 = vmatpush1.msra.mxu0 0.0
    %249 = vmatprep.subr.mxu0 0.0
    %250 = vmatpush1.msra.mxu0 0.0
    %251 = vmatprep.subr.mxu0 0.0
    %252 = vmatpush1.msra.mxu0 0.0
    %253 = vmatprep.subr.mxu0 0.0
    %254 = vmatpush1.msra.mxu0 0.0
    %255 = vmatprep.subr.mxu0 0.0
    %256 = vmatpush1.msra.mxu0 0.0
    %257 = vmatprep.subr.mxu0 0.0
    %258 = vmatpush1.msra.mxu0 0.0
    %259 = vmatprep.subr.mxu0 0.0
    %260 = vmatpush1.msra.mxu0 0.0
    %261 = vmatprep.subr.mxu0 0.0
    %262 = vmatpush1.msra.mxu0 0.0
    %263 = vmatprep.subr.mxu0 0.0
    %264 = vmatpush1.msra.mxu0 0.0
    %265 = vmatprep.subr.mxu0 0.0
    %266 = vmatpush1.msra.mxu0 0.0
    %267 = vmatprep.subr.mxu0 0.0
    %268 = vmatpush1.msra.mxu0 0.0
    %269 = vmatprep.mubr.f32.mxu0 0.0
    %270 = vmatmul.mubr.f32.gmra.mrb[0].mxu0 %v180
    %v271 = vpop.f32.mrb[0].mxu0
    %v272 = vadd.f32 %v203, %v271
    %v273 = vpop.f32.mrb[0].mxu0
    %274 = vmatprep.mubr.f32.mxu0 0.0
    %275 = vmatmul.mubr.f32.gmra.mrb[0].mxu0 %v181
    %v276 = vpop.f32.mrb[0].mxu0
    %v277 = vadd.f32 %v203, %v276
    %v278 = vpop.f32.mrb[0].mxu0
    %279 = vdwg.mxu0
    %280 = vst [vmem:[#allocation8] sm:$0xff] %v272
    %281 = vst [vmem:[#allocation8 + $0x8] sm:$0xff] %v277
    // Predicated region
    $region34: #{nn_forward.1} parent=1 // pred_check
      _
    $region35: #{nn_forward.1} parent=1 // pred_check_branch
      %283 = sbr.rel (0) target = $region37
    $region36: #{nn_forward.1} parent=1 // pred_region
      %s285 = ssub.s32 256, 128
      %286 = vsyncadd [#allocation4], %s285
      %s287 = sshll.u32 [#allocation8], 4
      %s288 = int_to_ptr.vmem [resolvable:$true] %s287
      %293 = dma.vmem_to_hbm [thread:$0]  %s288, 128, %s5, [#allocation4], 128, 128, 8
    $region37: #{nn_forward.1} parent=1 // pred_fallthru
      _
    // Predicated region
    $region38: #{nn_forward.1} parent=1 // pred_check
      _
    $region39: #{nn_forward.1} parent=1 // pred_check_branch
      %295 = sbr.rel (0) target = $region41
    $region40: #{nn_forward.1} parent=1 // pred_region
      %296 = dma.done [#allocation4], 256
    $region41: #{nn_forward.1} parent=1 // pred_fallthru
      _
    %297 = vsyncpa [#allocation3], 1
    %298 = vsyncpa [#allocation6], 1
    %299 = vsyncpa [#allocation4], 1

</llo_original>
